<compile_context>
chip_gen: v7x
topology: tpu7x:2x2x1
jax: 0.10.0
libtpu: 0.0.40
codegen_flags: <defaults>
</compile_context>

<pallas_src>
import functools
import math

import jax
import jax.numpy as jnp
from jax.experimental import pallas as pl
from jax.experimental.pallas import tpu as pltpu

BF16 = jnp.bfloat16


# ----------------------------------------------------------------------------
# helpers
# ----------------------------------------------------------------------------
def _round_up(x, m):
    return (x + m - 1) // m * m


def _pick_div_tile(dim, cap, mult):
    """Largest multiple of `mult` <= cap that divides `dim` (dim % mult == 0)."""
    t = min(cap, dim)
    t -= t % mult
    while t >= mult:
        if dim % t == 0:
            return t
        t -= mult
    return mult


def _seq_tile(s, cap):
    """Row/sequence tile: full dim if small, else a multiple-of-16 divisor."""
    if s <= cap:
        return s
    t = cap - cap % 16
    while t >= 16:
        if s % t == 0:
            return t
        t -= 16
    return s


def _chan_tile(c, cap):
    """Channel tile: multiple-of-128 divisor when possible, else the full dim
    (avoids 320->384 / 960->1024 padded MXU columns)."""
    if c % 128 == 0:
        return _pick_div_tile(c, cap, 128)
    return c


def _mm_dim(dim, cap):
    """(padded_dim, tile) for a matmul K/N dimension."""
    if dim % 128 == 0:
        return dim, _pick_div_tile(dim, cap, 128)
    if dim <= 1024:
        return dim, dim                     # full-dim block: zero padded FLOPs for 320/960
    p = _round_up(dim, 128)
    return p, _pick_div_tile(p, cap, 128)


def _strip_rows(h, w):
    """Output-row strip height for the 3x3 conv (keeps blocks inside VMEM)."""
    if h * w <= 1024:
        return h
    for cand in range(h, 0, -1):
        if h % cand == 0 and cand * w <= 1024:
            return cand
    return 1


def _vmem_limit_bytes():
    try:
        cap = int(pltpu.get_tpu_info().vmem_capacity_bytes)
    except Exception:                       # conservative fallback if query unavailable
        cap = 64 * 1024 * 1024
    return int(min(max(cap // 2, 32 * 1024 * 1024), 96 * 1024 * 1024))


_VMEM_LIMIT = _vmem_limit_bytes()


def _params(sem):
    return pltpu.CompilerParams(dimension_semantics=sem, vmem_limit_bytes=_VMEM_LIMIT)


# ----------------------------------------------------------------------------
# matmul (Linear / 1x1 conv) with fused bias / residual / SiLU epilogue
# ----------------------------------------------------------------------------
def _matmul_kernel(a_ref, b_ref, *rest, act, has_bias, has_res, multi_k):
    idx = 0
    bias_ref = rest[idx] if has_bias else None
    idx += int(has_bias)
    res_ref = rest[idx] if has_res else None
    idx += int(has_res)
    o_ref = rest[idx]
    acc_ref = rest[idx + 1] if multi_k else None

    def epilogue(r):
        if has_bias:
            r = r + bias_ref[...]
        if has_res:
            r = r + res_ref[...].astype(jnp.float32)
        if act == "silu":
            r = r * jax.nn.sigmoid(r)
        o_ref[...] = r.astype(o_ref.dtype)

    part = jnp.dot(a_ref[...], b_ref[...], preferred_element_type=jnp.float32)
    if multi_k:
        @pl.when(pl.program_id(2) == 0)
        def _():
            acc_ref[...] = jnp.zeros_like(acc_ref)

        acc_ref[...] += part

        @pl.when(pl.program_id(2) == pl.num_programs(2) - 1)
        def _():
            epilogue(acc_ref[...])
    else:
        epilogue(part)


@functools.partial(jax.jit, static_argnames=("act", "out_dtype"))
def _matmul_call(a, w, bias, residual, *, act, out_dtype):
    M, K = a.shape
    _, N = w.shape
    Mp = _round_up(max(M, 16), 16)
    tm = _pick_div_tile(Mp, 256, 16)
    Kp, tk = _mm_dim(K, 1024)
    Np, tn = _mm_dim(N, 512)
    nk = Kp // tk
    multi_k = nk > 1

    a_p = a.astype(BF16)
    if (Mp, Kp) != (M, K):
        a_p = jnp.pad(a_p, ((0, Mp - M), (0, Kp - K)))
    w_p = w.astype(BF16)
    if (Kp, Np) != (K, N):
        w_p = jnp.pad(w_p, ((0, Kp - K), (0, Np - N)))

    inputs = [a_p, w_p]
    in_specs = [pl.BlockSpec((tm, tk), lambda i, j, k: (i, k)),
                pl.BlockSpec((tk, tn), lambda i, j, k: (k, j))]
    if bias is not None:
        b_p = bias.astype(jnp.float32)
        if Np != N:
            b_p = jnp.pad(b_p, (0, Np - N))
        inputs.append(b_p.reshape(1, Np))
        in_specs.append(pl.BlockSpec((1, tn), lambda i, j, k: (0, j)))
    if residual is not None:
        r_p = residual.astype(BF16)
        if (Mp, Np) != (M, N):
            r_p = jnp.pad(r_p, ((0, Mp - M), (0, Np - N)))
        inputs.append(r_p)
        in_specs.append(pl.BlockSpec((tm, tn), lambda i, j, k: (i, j)))

    kernel = functools.partial(_matmul_kernel, act=act, has_bias=bias is not None,
                               has_res=residual is not None, multi_k=multi_k)
    out = pl.pallas_call(
        kernel,
        out_shape=jax.ShapeDtypeStruct((Mp, Np), out_dtype),
        grid=(Mp // tm, Np // tn, nk),
        in_specs=in_specs,
        out_specs=pl.BlockSpec((tm, tn), lambda i, j, k: (i, j)),
        scratch_shapes=[pltpu.VMEM((tm, tn), jnp.float32)] if multi_k else [],
        compiler_params=_params(("parallel", "parallel", "arbitrary")),
    )(*inputs)
    if (Mp, Np) != (M, N):
        out = out[:M, :N]
    return out


def pallas_matmul(a, w, b=None, residual=None, act="none", out_dtype=BF16):
    return _matmul_call(a, w, b, residual, act=act, out_dtype=out_dtype)


# ----------------------------------------------------------------------------
# fused GEGLU: out = (x @ W_x + b_x) * gelu(x @ W_g + b_g)
# ----------------------------------------------------------------------------
def _erf_approx(x):
    # Abramowitz & Stegun 7.1.26 (|err| < 1.5e-7 -> exact at bf16 output precision).
    a1, a2, a3, a4, a5 = 0.254829592, -0.284496736, 1.421413741, -1.453152027, 1.061405429
    p = 0.3275911
    s = jnp.where(x >= 0.0, 1.0, -1.0)
    ax = jnp.abs(x)
    t = 1.0 / (1.0 + p * ax)
    poly = ((((a5 * t + a4) * t + a3) * t + a2) * t + a1) * t
    return s * (1.0 - poly * jnp.exp(-ax * ax))


def _gelu_exact(x):
    return 0.5 * x * (1.0 + _erf_approx(x * 0.7071067811865476))


def _geglu_kernel(a_ref, w_ref, b_ref, o_ref):
    a = a_ref[...]
    xg = jnp.dot(a, w_ref[:, 0, :], preferred_element_type=jnp.float32) + b_ref[0:1, :]
    gate = jnp.dot(a, w_ref[:, 1, :], preferred_element_type=jnp.float32) + b_ref[1:2, :]
    o_ref[...] = (xg * _gelu_exact(gate)).astype(o_ref.dtype)


@jax.jit
def _geglu_call(x, w, bias):
    M, K = x.shape
    Nh = w.shape[1] // 2
    Mp = _round_up(max(M, 16), 16)
    tm = _pick_div_tile(Mp, 256, 16)
    tn = _pick_div_tile(Nh, 512, 128)
    x_p = x.astype(BF16)
    if Mp != M:
        x_p = jnp.pad(x_p, ((0, Mp - M), (0, 0)))
    w3 = w.reshape(K, 2, Nh).astype(BF16)
    b2 = bias.astype(jnp.float32).reshape(2, Nh)
    out = pl.pallas_call(
        _geglu_kernel,
        out_shape=jax.ShapeDtypeStruct((Mp, Nh), BF16),
        grid=(Mp // tm, Nh // tn),
        in_specs=[
            pl.BlockSpec((tm, K), lambda i, j: (i, 0)),
            pl.BlockSpec((K, 2, tn), lambda i, j: (0, 0, j)),
            pl.BlockSpec((2, tn), lambda i, j: (0, j)),
        ],
        out_specs=pl.BlockSpec((tm, tn), lambda i, j: (i, j)),
        compiler_params=_params(("parallel", "parallel")),
    )(x_p, w3, b2)
    return out[:M] if Mp != M else out


# ----------------------------------------------------------------------------
# 3x3 conv (padding=1), row-strip tiled, fused bias (+time) and residual
# ----------------------------------------------------------------------------
def _conv3_kernel(x_ref, w_ref, b_ref, *rest, th, wo, has_res, multi_k):
    if has_res:
        res_ref, o_ref = rest[0], rest[1]
    else:
        res_ref, o_ref = None, rest[0]
    acc_ref = rest[-1] if multi_k else None

    # 3 column-shifted copies hoisted out of the row-tap loop (3 relayouts, not 9).
    cols = [x_ref[0, :, dj:dj + wo, :] for dj in range(3)]

    def taps():
        acc = None
        for di in range(3):
            for dj in range(3):
                win = cols[dj][di:di + th].reshape(th * wo, -1)
                part = jnp.dot(win, w_ref[di * 3 + dj],
                               preferred_element_type=jnp.float32)
                acc = part if acc is None else acc + part
        return acc

    def epilogue(r):
        r = r + b_ref[...]
        if has_res:
            r = r + res_ref[0].reshape(th * wo, -1).astype(jnp.float32)
        o_ref[0] = r.reshape(th, wo, r.shape[-1]).astype(o_ref.dtype)

    if multi_k:
        @pl.when(pl.program_id(3) == 0)
        def _():
            acc_ref[...] = jnp.zeros_like(acc_ref)

        acc_ref[...] += taps()

        @pl.when(pl.program_id(3) == pl.num_programs(3) - 1)
        def _():
            epilogue(acc_ref[...])
    else:
        epilogue(taps())


@jax.jit
def _conv3_call(x, w, bias, residual, extra_bias):
    N, H, W, Cin = x.shape
    Cout = w.shape[2]
    tci = _chan_tile(Cin, 640)
    tco = _chan_tile(Cout, 256)
    th = _strip_rows(H, W)
    n_strips = H // th
    nci = Cin // tci
    multi_k = nci > 1

    x_p = jnp.pad(x.astype(BF16), ((0, 0), (1, 1), (1, 1), (0, 0)))
    w_b = w.astype(BF16)
    b_f = bias.astype(jnp.float32)
    if extra_bias is not None:
        b_f = b_f + extra_bias.astype(jnp.float32)       # fused time-embedding bias (B==1)
    b_2 = b_f.reshape(1, Cout)

    if n_strips == 1:
        x_spec = pl.BlockSpec((1, H + 2, W + 2, tci), lambda n, h, j, k: (n, 0, 0, k))
    else:
        # Overlapping row strips with a 2-row halo (element offsets on the H axis).
        x_spec = pl.BlockSpec((1, pl.Element(th + 2), W + 2, tci),
                              lambda n, h, j, k: (n, h * th, 0, k))

    inputs = [x_p, w_b, b_2]
    in_specs = [x_spec,
                pl.BlockSpec((9, tci, tco), lambda n, h, j, k: (0, k, j)),
                pl.BlockSpec((1, tco), lambda n, h, j, k: (0, j))]
    if residual is not None:
        inputs.append(residual.astype(BF16))
        in_specs.append(pl.BlockSpec((1, th, W, tco), lambda n, h, j, k: (n, h, 0, j)))

    kernel = functools.partial(_conv3_kernel, th=th, wo=W,
                               has_res=residual is not None, multi_k=multi_k)
    out = pl.pallas_call(
        kernel,
        out_shape=jax.ShapeDtypeStruct((N, H, W, Cout), BF16),
        grid=(N, n_strips, Cout // tco, nci),
        in_specs=in_specs,
        out_specs=pl.BlockSpec((1, th, W, tco), lambda n, h, j, k: (n, h, 0, j)),
        scratch_shapes=[pltpu.VMEM((th * W, tco), jnp.float32)] if multi_k else [],
        compiler_params=_params(("parallel", "parallel", "parallel", "arbitrary")),
    )(*inputs)
    return out


# ----------------------------------------------------------------------------
# GroupNorm: two-pass, spatially tiled, bf16 in/out, fused affine (+ SiLU)
# ----------------------------------------------------------------------------
def _gn_stats_kernel(x_ref, gmap_ref, gamma_ref, beta_ref, o_ref, s_sc, s2_sc, *,
                     count, eps):
    t = pl.program_id(1)

    @pl.when(t == 0)
    def _():
        s_sc[...] = jnp.zeros_like(s_sc)
        s2_sc[...] = jnp.zeros_like(s2_sc)

    x = x_ref[0].astype(jnp.float32)                               # (ts, C)
    s_sc[...] += jnp.sum(x, axis=0, keepdims=True)
    s2_sc[...] += jnp.sum(x * x, axis=0, keepdims=True)

    @pl.when(t == pl.num_programs(1) - 1)
    def _():
        gmap = gmap_ref[...]                                       # (G, C)
        sum_g = jax.lax.dot_general(s_sc[...], gmap, (((1,), (1,)), ((), ())),
                                    preferred_element_type=jnp.float32)
        sum2_g = jax.lax.dot_general(s2_sc[...], gmap, (((1,), (1,)), ((), ())),
                                     preferred_element_type=jnp.float32)
        mean_g = sum_g * (1.0 / count)
        var_g = jnp.maximum(sum2_g * (1.0 / count) - mean_g * mean_g, 0.0)
        rstd_g = jax.lax.rsqrt(var_g + eps)
        mean_c = jnp.dot(mean_g, gmap, preferred_element_type=jnp.float32)   # (1, C)
        rstd_c = jnp.dot(rstd_g, gmap, preferred_element_type=jnp.float32)
        scale = gamma_ref[...] * rstd_c
        shift = beta_ref[...] - mean_c * scale
        o_ref[0, 0:1, :] = scale
        o_ref[0, 1:2, :] = shift


def _gn_apply_kernel(x_ref, ss_ref, o_ref, *, fuse_silu):
    x = x_ref[0].astype(jnp.float32)
    ss = ss_ref[0]
    y = x * ss[0:1, :] + ss[1:2, :]
    if fuse_silu:
        y = y * jax.nn.sigmoid(y)
    o_ref[0] = y.astype(o_ref.dtype)


@functools.partial(jax.jit, static_argnames=("groups", "fuse_silu"))
def _group_norm(x, gamma, beta, *, groups, fuse_silu):
    N, H, W, C = x.shape
    HW = H * W
    xr = x.reshape(N, HW, C).astype(BF16)
    ts = _seq_tile(HW, 1024)
    nt = HW // ts
    gmap = jnp.repeat(jnp.eye(groups, dtype=jnp.float32), C // groups, axis=1)

    ss = pl.pallas_call(
        functools.partial(_gn_stats_kernel, count=float(HW * (C // groups)), eps=1e-5),
        out_shape=jax.ShapeDtypeStruct((N, 2, C), jnp.float32),
        grid=(N, nt),
        in_specs=[
            pl.BlockSpec((1, ts, C), lambda n, t: (n, t, 0)),
            pl.BlockSpec((groups, C), lambda n, t: (0, 0)),
            pl.BlockSpec((1, C), lambda n, t: (0, 0)),
            pl.BlockSpec((1, C), lambda n, t: (0, 0)),
        ],
        out_specs=pl.BlockSpec((1, 2, C), lambda n, t: (n, 0, 0)),
        scratch_shapes=[pltpu.VMEM((1, C), jnp.float32),
                        pltpu.VMEM((1, C), jnp.float32)],
        compiler_params=_params(("parallel", "arbitrary")),
    )(xr, gmap, gamma.reshape(1, C), beta.reshape(1, C))

    out = pl.pallas_call(
        functools.partial(_gn_apply_kernel, fuse_silu=fuse_silu),
        out_shape=jax.ShapeDtypeStruct((N, HW, C), BF16),
        grid=(N, nt),
        in_specs=[
            pl.BlockSpec((1, ts, C), lambda n, t: (n, t, 0)),
            pl.BlockSpec((1, 2, C), lambda n, t: (n, 0, 0)),
        ],
        out_specs=pl.BlockSpec((1, ts, C), lambda n, t: (n, t, 0)),
        compiler_params=_params(("parallel", "parallel")),
    )(xr, ss)
    return out.reshape(N, H, W, C)


# ----------------------------------------------------------------------------
# LayerNorm (row tiled, fused affine)
# ----------------------------------------------------------------------------
def _layernorm_kernel(x_ref, g_ref, b_ref, o_ref):
    x = x_ref[...].astype(jnp.float32)
    mu = jnp.mean(x, axis=-1, keepdims=True)
    xc = x - mu
    var = jnp.mean(xc * xc, axis=-1, keepdims=True)
    y = xc * jax.lax.rsqrt(var + 1e-5) * g_ref[...] + b_ref[...]
    o_ref[...] = y.astype(o_ref.dtype)


@jax.jit
def _layer_norm_rows(x, gamma, beta):
    M, C = x.shape
    Mp = _round_up(max(M, 16), 16)
    tr = _pick_div_tile(Mp, 512, 16)
    x_p = x.astype(BF16)
    if Mp != M:
        x_p = jnp.pad(x_p, ((0, Mp - M), (0, 0)))
    out = pl.pallas_call(
        _layernorm_kernel,
        out_shape=jax.ShapeDtypeStruct((Mp, C), BF16),
        grid=(Mp // tr,),
        in_specs=[
            pl.BlockSpec((tr, C), lambda i: (i, 0)),
            pl.BlockSpec((1, C), lambda i: (0, 0)),
            pl.BlockSpec((1, C), lambda i: (0, 0)),
        ],
        out_specs=pl.BlockSpec((tr, C), lambda i: (i, 0)),
        compiler_params=_params(("parallel",)),
    )(x_p, gamma.reshape(1, C), beta.reshape(1, C))
    return out[:M] if Mp != M else out


# ----------------------------------------------------------------------------
# Flash-style attention (online softmax over KV tiles, lane-dense output)
# ----------------------------------------------------------------------------
def _flash_attn_kernel(q_ref, k_ref, v_ref, o_ref, m_sc, l_sc, acc_sc, *, scale, n_heads):
    j = pl.program_id(2)

    @pl.when(j == 0)
    def _():
        m_sc[...] = jnp.full(m_sc.shape, -1e30, m_sc.dtype)
        l_sc[...] = jnp.zeros_like(l_sc)
        acc_sc[...] = jnp.zeros_like(acc_sc)

    s = jax.lax.dot_general(q_ref[...], k_ref[...],
                            (((2,), (2,)), ((0,), (0,))),
                            preferred_element_type=jnp.float32) * scale    # (H, tq, tk)
    m_prev = m_sc[...]
    m_new = jnp.maximum(m_prev, jnp.max(s, axis=-1, keepdims=True))
    alpha = jnp.exp(m_prev - m_new)
    p = jnp.exp(s - m_new)
    l_sc[...] = alpha * l_sc[...] + jnp.sum(p, axis=-1, keepdims=True)
    pv = jax.lax.dot_general(p.astype(BF16), v_ref[...],
                             (((2,), (1,)), ((0,), (0,))),
                             preferred_element_type=jnp.float32)            # (H, tq, dh)
    acc_sc[...] = alpha * acc_sc[...] + pv
    m_sc[...] = m_new

    @pl.when(j == pl.num_programs(2) - 1)
    def _():
        o = acc_sc[...] * pl.reciprocal(l_sc[...], approx=True)
        dh = o.shape[-1]
        for h in range(n_heads):      # lane-dense (tq, n_heads*dh) output block
            o_ref[0, :, h * dh:(h + 1) * dh] = o[h].astype(o_ref.dtype)


@functools.partial(jax.jit, static_argnames=("n_heads",))
def _flash_attention(q, k, v, *, n_heads):
    # TODO(synk): fold the head split below into the QKV projection output spec.
    B, Sq, C = q.shape
    Sk = k.shape[1]
    dh = C // n_heads

    def to_heads(t, s):
        return (t.astype(BF16).reshape(B, s, n_heads, dh)
                .transpose(0, 2, 1, 3).reshape(B * n_heads, s, dh))

    qh, kh, vh = to_heads(q, Sq), to_heads(k, Sk), to_heads(v, Sk)
    tq = _seq_tile(Sq, 256)
    tk = _seq_tile(Sk, 512)
    kernel = functools.partial(_flash_attn_kernel, scale=1.0 / math.sqrt(dh),
                               n_heads=n_heads)
    return pl.pallas_call(
        kernel,
        out_shape=jax.ShapeDtypeStruct((B, Sq, C), BF16),
        grid=(B, Sq // tq, Sk // tk),
        in_specs=[
            pl.BlockSpec((n_heads, tq, dh), lambda b, i, j: (b, i, 0)),
            pl.BlockSpec((n_heads, tk, dh), lambda b, i, j: (b, j, 0)),
            pl.BlockSpec((n_heads, tk, dh), lambda b, i, j: (b, j, 0)),
        ],
        out_specs=pl.BlockSpec((1, tq, C), lambda b, i, j: (b, i, 0)),
        scratch_shapes=[pltpu.VMEM((n_heads, tq, 1), jnp.float32),
                        pltpu.VMEM((n_heads, tq, 1), jnp.float32),
                        pltpu.VMEM((n_heads, tq, dh), jnp.float32)],
        compiler_params=_params(("parallel", "parallel", "arbitrary")),
    )(qh, kh, vh)


# ----------------------------------------------------------------------------
# NN layers (glue is reshape / pad / transpose / concat only)
# ----------------------------------------------------------------------------
def group_norm(x, p, fuse_silu=False):
    return _group_norm(x, p["gamma"], p["beta"], groups=32, fuse_silu=fuse_silu)


def layer_norm(x, p):
    B, S, C = x.shape
    return _layer_norm_rows(x.reshape(B * S, C), p["gamma"], p["beta"]).reshape(B, S, C)


def conv2d_1x1(x, p, residual=None):
    N, H, W, C = x.shape
    r = None if residual is None else residual.reshape(N * H * W, -1)
    out = pallas_matmul(x.reshape(N * H * W, C), p["w"], p["b"], residual=r)
    return out.reshape(N, H, W, -1)


def conv2d_3x3(x, p, stride=1, residual=None, extra_bias=None):
    y = _conv3_call(x, p["w"], p["b"], residual, extra_bias)
    if stride == 2:
        # TODO(synk): compute stride-2 taps directly (4x fewer MXU FLOPs on the three
        # downsample convs) instead of subsampling the stride-1 output.
        y = y[:, ::2, ::2, :]
    return y


def self_attention(x, p, n_heads):
    B, S, C = x.shape
    qkv = pallas_matmul(x.reshape(B * S, C), p["in_w"])            # no in_proj bias
    q, k, v = jnp.split(qkv, 3, axis=-1)
    return _flash_attention(q.reshape(B, S, C), k.reshape(B, S, C), v.reshape(B, S, C),
                            n_heads=n_heads)


def cross_attention(x, ctx, p, n_heads):
    B, S, C = x.shape
    T, Dc = ctx.shape[1], ctx.shape[2]
    q = pallas_matmul(x.reshape(B * S, C), p["q_w"])
    k = pallas_matmul(ctx.reshape(B * T, Dc), p["k_w"])
    v = pallas_matmul(ctx.reshape(B * T, Dc), p["v_w"])
    return _flash_attention(q.reshape(B, S, C), k.reshape(B, T, C), v.reshape(B, T, C),
                            n_heads=n_heads)


# ----------------------------------------------------------------------------
# UNet blocks
# ----------------------------------------------------------------------------
def residual_block(x, tproj, p):
    residual = x
    h = group_norm(x, p["gn_f"], fuse_silu=True)                   # GN + SiLU fused
    if x.shape[0] == 1:
        h = conv2d_3x3(h, p["conv_f"], extra_bias=tproj[0])        # time bias folded
    else:
        h = conv2d_3x3(h, p["conv_f"])
        h = (h.astype(jnp.float32) + tproj.reshape(1, 1, 1, -1)).astype(BF16)
    h = group_norm(h, p["gn_m"], fuse_silu=True)
    if "res_conv" in p:
        residual = conv2d_1x1(residual, p["res_conv"])
    return conv2d_3x3(h, p["conv_m"], residual=residual)           # residual fused


def attention_block(x, context, p, n_heads):
    residue_long = x
    h = group_norm(x, p["gn"], fuse_silu=False)
    h = conv2d_1x1(h, p["conv_in"])
    N, H, W, C = h.shape
    S = H * W
    h = h.reshape(N, S, C)

    res = h
    a = self_attention(layer_norm(h, p["ln1"]), p["att1"], n_heads)
    h = pallas_matmul(a.reshape(N * S, C), p["att1"]["out_w"], p["att1"]["out_b"],
                      residual=res.reshape(N * S, C)).reshape(N, S, C)

    res = h
    a = cross_attention(layer_norm(h, p["ln2"]), context, p["att2"], n_heads)
    h = pallas_matmul(a.reshape(N * S, C), p["att2"]["out_w"], p["att2"]["out_b"],
                      residual=res.reshape(N * S, C)).reshape(N, S, C)

    res = h
    g = _geglu_call(layer_norm(h, p["ln3"]).reshape(N * S, C),
                    p["geglu1"]["w"], p["geglu1"]["b"])             # fused GEGLU
    h = pallas_matmul(g, p["geglu2"]["w"], p["geglu2"]["b"],
                      residual=res.reshape(N * S, C)).reshape(N, H, W, C)

    return conv2d_1x1(h, p["conv_out"], residual=residue_long)


def upsample(x, p):
    # TODO(synk): fold the nearest x2 replication into the conv kernel's window reads.
    N, H, W, C = x.shape
    x2 = jnp.broadcast_to(x[:, :, None, :, None, :],
                          (N, H, 2, W, 2, C)).reshape(N, 2 * H, 2 * W, C)
    return conv2d_3x3(x2, p["conv"])


def output_layer(x, p):
    h = group_norm(x, p["gn"], fuse_silu=True)
    return conv2d_3x3(h, p["conv"])


# ----------------------------------------------------------------------------
# Architecture specs (decoder entries 7/9 use dataflow-consistent in_channels).
# ----------------------------------------------------------------------------
ENCODER = [
    [("conv3", 4, 320, 1)],
    [("res", 320, 320), ("attn", 8, 40)],
    [("res", 320, 320), ("attn", 8, 40)],
    [("conv3", 320, 320, 2)],
    [("res", 320, 640), ("attn", 8, 80)],
    [("res", 640, 640), ("attn", 8, 80)],
    [("conv3", 640, 640, 2)],
    [("res", 640, 1280), ("attn", 8, 160)],
    [("res", 1280, 1280), ("attn", 8, 160)],
    [("conv3", 1280, 1280, 2)],
    [("res", 1280, 1280)],
    [("res", 1280, 1280)],
]
BOTTLENECK = [("res", 1280, 1280), ("attn", 8, 160), ("res", 1280, 1280)]
DECODER = [
    [("res", 2560, 1280)],
    [("res", 2560, 1280)],
    [("res", 2560, 1280), ("up", 1280)],
    [("res", 2560, 1280), ("attn", 8, 160)],
    [("res", 2560, 1280), ("attn", 8, 160)],
    [("res", 1920, 1280), ("attn", 8, 160), ("up", 1280)],
    [("res", 1920, 640), ("attn", 8, 80)],    # reference declared 1280 (inconsistent)
    [("res", 1280, 640), ("attn", 8, 80)],
    [("res", 960, 640), ("attn", 8, 80), ("up", 640)],   # reference declared 640
    [("res", 960, 320), ("attn", 8, 40)],
    [("res", 640, 320), ("attn", 8, 40)],
    [("res", 640, 320), ("attn", 8, 40)],
]


# ----------------------------------------------------------------------------
# Deterministic parameter initialization (synthetic, no checkpoint)
# Matmul / conv weights stored in bf16; biases / norm params f32.
# ----------------------------------------------------------------------------
class ParamFactory:
    def __init__(self, key):
        self._key = key

    def _next(self):
        self._key, sub = jax.random.split(self._key)
        return sub

    def normal(self, shape, scale, dtype=jnp.float32):
        return (scale * jax.random.normal(self._next(), shape, jnp.float32)).astype(dtype)


def init_norm(c):
    return {"gamma": jnp.ones((c,), jnp.float32), "beta": jnp.zeros((c,), jnp.float32)}


def init_linear(pf, fin, fout, bias=True):
    p = {"w": pf.normal((fin, fout), 1.0 / math.sqrt(fin), BF16)}
    if bias:
        p["b"] = pf.normal((fout,), 0.02)
    return p


def init_conv3(pf, cin, cout):
    return {"w": pf.normal((9, cin, cout), 1.0 / math.sqrt(9 * cin), BF16),
            "b": pf.normal((cout,), 0.02)}


def init_conv1(pf, cin, cout):
    return {"w": pf.normal((cin, cout), 1.0 / math.sqrt(cin), BF16),
            "b": pf.normal((cout,), 0.02)}


def init_res(pf, cin, cout, n_time=1280):
    p = {"gn_f": init_norm(cin), "conv_f": init_conv3(pf, cin, cout),
         "lin_t": init_linear(pf, n_time, cout),
         "gn_m": init_norm(cout), "conv_m": init_conv3(pf, cout, cout)}
    if cin != cout:
        p["res_conv"] = init_conv1(pf, cin, cout)
    return p


def init_attention_block(pf, n_head, n_embed, d_context=768):
    C = n_head * n_embed
    return {
        "gn": init_norm(C),
        "conv_in": init_conv1(pf, C, C),
        "ln1": init_norm(C),
        "att1": {"in_w": pf.normal((C, 3 * C), 1.0 / math.sqrt(C), BF16),
                 "out_w": pf.normal((C, C), 1.0 / math.sqrt(C), BF16),
                 "out_b": jnp.zeros((C,), jnp.float32)},
        "ln2": init_norm(C),
        "att2": {"q_w": pf.normal((C, C), 1.0 / math.sqrt(C), BF16),
                 "k_w": pf.normal((d_context, C), 1.0 / math.sqrt(d_context), BF16),
                 "v_w": pf.normal((d_context, C), 1.0 / math.sqrt(d_context), BF16),
                 "out_w": pf.normal((C, C), 1.0 / math.sqrt(C), BF16),
                 "out_b": jnp.zeros((C,), jnp.float32)},
        "ln3": init_norm(C),
        "geglu1": init_linear(pf, C, 4 * C * 2),
        "geglu2": init_linear(pf, 4 * C, C),
        "conv_out": init_conv1(pf, C, C),
    }


def init_layer(pf, spec):
    kind = spec[0]
    if kind == "conv3":
        return init_conv3(pf, spec[1], spec[2])
    if kind == "res":
        return init_res(pf, spec[1], spec[2])
    if kind == "attn":
        return init_attention_block(pf, spec[1], spec[2])
    if kind == "up":
        return {"conv": init_conv3(pf, spec[1], spec[1])}
    raise ValueError(kind)


def init_diffusion(pf):
    return {
        "time_emb": {"l1": init_linear(pf, 320, 1280), "l2": init_linear(pf, 1280, 1280)},
        "unet": {
            "encoder": [[init_layer(pf, s) for s in block] for block in ENCODER],
            "bottleneck": [init_layer(pf, s) for s in BOTTLENECK],
            "decoder": [[init_layer(pf, s) for s in block] for block in DECODER],
        },
        "final": {"gn": init_norm(320), "conv": init_conv3(pf, 320, 4)},
    }


def _iter_res_blocks(unet):
    for group in unet["encoder"]:
        for p in group:
            if isinstance(p, dict) and "lin_t" in p:
                yield p
    for p in unet["bottleneck"]:
        if isinstance(p, dict) and "lin_t" in p:
            yield p
    for group in unet["decoder"]:
        for p in group:
            if isinstance(p, dict) and "lin_t" in p:
                yield p


def _build_time_table(params):
    """Concatenate all residual-block time projections into one matmul table."""
    ws, bs, off = [], [], 0
    for p in _iter_res_blocks(params["unet"]):
        w, b = p["lin_t"]["w"], p["lin_t"]["b"]
        p["t_slice"] = (off, w.shape[1])
        ws.append(w)
        bs.append(b)
        off += w.shape[1]
        del p["lin_t"]
    params["time_w"] = jnp.concatenate(ws, axis=1)
    params["time_b"] = jnp.concatenate(bs, axis=0)


# ----------------------------------------------------------------------------
# Forward
# ----------------------------------------------------------------------------
def run_layer(x, context, tproj_all, spec, p):
    kind = spec[0]
    if kind == "conv3":
        return conv2d_3x3(x, p, stride=spec[3])
    if kind == "res":
        off, cout = p["t_slice"]
        return residual_block(x, tproj_all[:, off:off + cout], p)
    if kind == "attn":
        return attention_block(x, context, p, n_heads=spec[1])
    if kind == "up":
        return upsample(x, p)
    raise ValueError(kind)


def run_switch(x, context, tproj_all, specs, params):
    for spec, p in zip(specs, params):
        x = run_layer(x, context, tproj_all, spec, p)
    return x


def unet_forward(x, context, tproj_all, p):
    skips = []
    for specs, params in zip(ENCODER, p["encoder"]):
        x = run_switch(x, context, tproj_all, specs, params)
        skips.append(x)
    x = run_switch(x, context, tproj_all, BOTTLENECK, p["bottleneck"])
    for specs, params in zip(DECODER, p["decoder"]):
        # TODO(synk): fold the skip concat into the GN stats / conv Cin reduction.
        x = jnp.concatenate([x, skips.pop()], axis=-1)    # bf16 channel concat (NHWC)
        x = run_switch(x, context, tproj_all, specs, params)
    return x


def diffusion_forward(latent_nchw, context, time, params):
    # TimeEmbedding: linear -> SiLU (fused epilogue) -> linear (kept in f32, tiny).
    t = pallas_matmul(time, params["time_emb"]["l1"]["w"], params["time_emb"]["l1"]["b"],
                      act="silu", out_dtype=jnp.float32)
    t = pallas_matmul(t, params["time_emb"]["l2"]["w"], params["time_emb"]["l2"]["b"],
                      out_dtype=jnp.float32)
    # Every residual block applies F.silu(time) @ W_time: hoist the SiLU once and
    # batch all ~25 projections into a single matmul.
    t_silu = t * jax.nn.sigmoid(t)
    tproj_all = pallas_matmul(t_silu, params["time_w"], params["time_b"],
                              out_dtype=jnp.float32)

    x = jnp.transpose(latent_nchw, (0, 2, 3, 1))           # NCHW -> NHWC
    x = unet_forward(x, context.astype(BF16), tproj_all, params["unet"])
    x = output_layer(x, params["final"])
    return jnp.transpose(x, (0, 3, 1, 2)).astype(jnp.float32)   # NHWC -> NCHW


# ----------------------------------------------------------------------------
# main
# ----------------------------------------------------------------------------
if __name__ == "__main__":
    key = jax.random.PRNGKey(0)
    k_lat, k_ctx, k_time, k_par = jax.random.split(key, 4)

    B, H, W = 1, 8, 8            # smallest spatial that survives 3 stride-2 downsamples
    T_CTX = 8
    latent = jax.random.normal(k_lat, (B, 4, H, W), jnp.float32)
    context = jax.random.normal(k_ctx, (B, T_CTX, 768), jnp.float32)
    time = jax.random.normal(k_time, (1, 320), jnp.float32)

    params = init_diffusion(ParamFactory(k_par))
    _build_time_table(params)

    out = diffusion_forward(latent, context, time, params)
    out = jax.block_until_ready(out)

    assert out.shape == (B, 4, H, W), out.shape
    assert bool(jnp.isfinite(out).all())
    print("KERNEL_OK")
</pallas_src>

<mosaic_0001>
module attributes {stable_mosaic.version = 11 : i64} {
  func.func @_matmul_kernel(%arg0: i32, %arg1: i32, %arg2: i32, %arg3: memref<16x320xbf16, #tpu.memory_space<vmem>>, %arg4: memref<320x256xbf16, #tpu.memory_space<vmem>>, %arg5: memref<1x256xf32, #tpu.memory_space<vmem>>, %arg6: memref<16x256xf32, #tpu.memory_space<vmem>>) attributes {dimension_semantics = [#tpu.dimension_semantics<parallel>, #tpu.dimension_semantics<parallel>, #tpu.dimension_semantics<arbitrary>], iteration_bounds = array<i64: 1, 5, 1>, scalar_prefetch = 0 : i64, scratch_operands = 0 : i64, tpu.core_type = #tpu.core_type<tc>, window_params = [{transform_indices = @transform_0, window_bounds = array<i64: 16, 320>}, {transform_indices = @transform_1, window_bounds = array<i64: 320, 256>}, {transform_indices = @transform_2, window_bounds = array<i64: 1, 256>}, {transform_indices = @transform_3, window_bounds = array<i64: 16, 256>}]} {
    %c0 = arith.constant 0 : index
    %c0_0 = arith.constant 0 : index
    %0 = vector.load %arg3[%c0, %c0_0] : memref<16x320xbf16, #tpu.memory_space<vmem>>, vector<16x320xbf16>
    %c0_1 = arith.constant 0 : index
    %c0_2 = arith.constant 0 : index
    %1 = vector.load %arg4[%c0_1, %c0_2] : memref<320x256xbf16, #tpu.memory_space<vmem>>, vector<320x256xbf16>
    %cst = arith.constant dense<0.000000e+00> : vector<16x256xf32>
    %2 = tpu.matmul %0, %1, %cst {dimension_numbers = #tpu.dot_dimension_numbers<[1], [0], [0], [1], [0, 0, 1, 1], [], []>} : vector<16x320xbf16>, vector<320x256xbf16>, vector<16x256xf32> -> vector<16x256xf32>
    %c0_3 = arith.constant 0 : index
    %c0_4 = arith.constant 0 : index
    %3 = vector.load %arg5[%c0_3, %c0_4] : memref<1x256xf32, #tpu.memory_space<vmem>>, vector<1x256xf32>
    %4 = vector.broadcast %3 : vector<1x256xf32> to vector<16x256xf32>
    %5 = arith.addf %2, %4 : vector<16x256xf32>
    %6 = arith.negf %5 : vector<16x256xf32>
    %7 = math.exp %6 : vector<16x256xf32>
    %cst_5 = arith.constant 1.000000e+00 : f32
    %8 = vector.broadcast %cst_5 : f32 to vector<16x256xf32>
    %9 = arith.addf %8, %7 : vector<16x256xf32>
    %10 = arith.divf %8, %9 : vector<16x256xf32>
    %11 = arith.mulf %5, %10 : vector<16x256xf32>
    %c0_6 = arith.constant 0 : index
    %c0_7 = arith.constant 0 : index
    %12 = vector.load %arg6[%c0_6, %c0_7] : memref<16x256xf32, #tpu.memory_space<vmem>>, vector<16x256xf32>
    tpu.vector_store %arg6[%c0_6, %c0_7], %11 {strides = array<i32>} : memref<16x256xf32, #tpu.memory_space<vmem>>, vector<16x256xf32>,
    return
  }
  func.func @transform_0(%arg0: i32, %arg1: i32, %arg2: i32) -> (i32, i32) {
    %c0_i32 = arith.constant 0 : i32
    return %arg0, %arg2 : i32, i32
  }
  func.func @transform_1(%arg0: i32, %arg1: i32, %arg2: i32) -> (i32, i32) {
    %c0_i32 = arith.constant 0 : i32
    return %arg2, %arg1 : i32, i32
  }
  func.func @transform_2(%arg0: i32, %arg1: i32, %arg2: i32) -> (i32, i32) {
    %c0_i32 = arith.constant 0 : i32
    %c0_i32_0 = arith.constant 0 : i32
    return %c0_i32, %arg1 : i32, i32
  }
  func.func @transform_3(%arg0: i32, %arg1: i32, %arg2: i32) -> (i32, i32) {
    %c0_i32 = arith.constant 0 : i32
    return %arg0, %arg1 : i32, i32
  }
}

</mosaic_0001>

<llo_original>
// kernel: _matmul_call.1
$region0: #{_matmul_call.1}
  #allocation0 [shape = 'u32[]', space=smem, size = 0x4, offset = 0x4, fixed_abs, tag = 'smem constant byte address 0x4 - core index']
  #allocation1 [shape = 'u32[144,128]{1,0:T(1,128)}', space=vmem, size = 0x12000, scoped, tag = 'internal scratch']
  %s0 = inlined_call_operand.vmem [shape: bf16[16,320], index: 0, kind: input, shape index: {}]
  %s1 = inlined_call_operand.hbm [shape: bf16[320,1280], index: 1, kind: input, shape index: {}]
  %s2 = inlined_call_operand.vmem [shape: f32[1,1280], index: 2, kind: input, shape index: {}]
  %s3 = inlined_call_operand.vmem [shape: f32[16,1280], index: 3, kind: output, shape index: {}]
  %s4 = sld [smem:[#allocation0]]
  $region68: #{_matmul_call.1} parent=0
    _
  %s6 = ssub.s32 1, %s4
  %s7 = scalar_select 0, %s6, %s4
  $region1: #{_matmul_call.1} parent=0
    #allocation2 [shape = 'u8[327680]{0}', space=vmem, size = 0x50000, scoped, tag = 'input window, operand 1']
    #allocation3 [shape = 's32[2]{0}', space=sflag, size = 0x8, scoped, tag = 'scoped memory for _matmul_call.1']
    #allocation4 [shape = 'u8[32768]{0}', space=vmem, size = 0x8000, scoped, tag = 'output window, operand 0']
    %8 = vsyncpa [#allocation3], 0
    %s9 = scalar_lea.sflag [#allocation3], 1
    %10 = vsyncpa %s9, 0
    loop: start=0, step=1, limit=7
    $region2: #{_matmul_call.1} parent=1 // loop_pre_header
      _
    $region3: #{_matmul_call.1} parent=1 // loop_header
      %s12 = sphi 0, %s16
      %p13 = scmp.ge.s32.totalorder %s12, 7
      %s19 = sphi 0, %s38
      %s20 = sphi 0, %s34
      %s21 = sphi 0, %s30
      %s22 = sphi 0, %s19
      %s23 = sphi 0, %s20
      %s24 = sphi 0, %s21
      %s25 = sphi 0, %s22
      %s26 = sphi 0, %s23
      %s27 = sphi 0, %s24
      %s43 = sphi 0, %s45
      %s46 = sphi 0, %s43
      %s47 = sphi 0, %s46
      %s63 = sphi 0, %s47
      %s71 = sphi 0, %s73
      %s74 = sphi 0, %s71
      %s75 = sphi 0, %s74
      %s91 = sphi 0, %s75
      %s97 = sphi 0, %s99
      %s100 = sphi 0, %s97
      %s101 = sphi 0, %s100
      %s117 = sphi 0, %s101
      %s125 = sphi 0, %s127
      %s128 = sphi 0, %s125
      %s129 = sphi 0, %s128
      %s145 = sphi 0, %s129
    $region4: #{_matmul_call.1} parent=1 // loop_header_branch
      %15 = sbr.rel (%p13) target = $region8
    $region5: #{_matmul_call.1} parent=1 // loop_body
      %s17 = ssub.s32 %s12, 1
      %s18 = ssub.s32 %s12, 2
      %s28 = sadd.s32 1, %s21
      %p29 = scmp.ge.s32.totalorder %s28, 1
      %s30 = scalar_select %p29, 0, %s28
      %s31 = sadd.s32 1, %s20
      %s32 = scalar_select %p29, %s31, %s20
      %p33 = scmp.ge.s32.totalorder %s32, 5
      %s34 = scalar_select %p33, 0, %s32
      %s35 = sadd.s32 1, %s19
      %s36 = scalar_select %p33, %s35, %s19
      %p37 = scmp.ge.s32.totalorder %s36, 1
      %s38 = scalar_select %p37, 0, %s36
      %s39 = ssub.s32 %s19, %s38
      %s40 = ssub.s32 %s21, %s30
      %s41 = sor.u32 %s39, %s40
      %p42 = scmp.eq.s32.totalorder %s41, 0
      %s44 = sadd.s32 %s43, 1
      %s45 = scalar_select %p42, %s43, %s44
      %p48 = pneg %p42
      %p49 = scmp.eq.s32.totalorder %s12, 4
      %p50 = por %p48, %p49
      %p51 = scmp.ne.s32.totalorder %s43, %s46
      %p52 = scmp.eq.s32.totalorder %s12, 0
      %p53 = por %p51, %p52
      %p54 = scmp.ne.s32.totalorder %s43, %s46
      %p55 = scmp.eq.s32.totalorder %s17, 4
      %p56 = por %p54, %p55
      %p57 = scmp.ne.s32.totalorder %s46, %s47
      %p58 = scmp.eq.s32.totalorder %s17, 0
      %p59 = por %p57, %p58
      %p60 = scmp.ne.s32.totalorder %s46, %s47
      %p61 = scmp.eq.s32.totalorder %s18, 4
      %p62 = por %p60, %p61
      %p64 = scmp.ne.s32.totalorder %s47, %s63
      %p65 = scmp.eq.s32.totalorder %s18, 0
      %p66 = por %p64, %p65
      %s67 = ssub.s32 %s21, %s30
      %s68 = ssub.s32 %s20, %s34
      %s69 = sor.u32 %s67, %s68
      %p70 = scmp.eq.s32.totalorder %s69, 0
      %s72 = sadd.s32 %s71, 1
      %s73 = scalar_select %p70, %s71, %s72
      %p76 = pneg %p70
      %p77 = scmp.eq.s32.totalorder %s12, 4
      %p78 = por %p76, %p77
      %p79 = scmp.ne.s32.totalorder %s71, %s74
      %p80 = scmp.eq.s32.totalorder %s12, 0
      %p81 = por %p79, %p80
      %p82 = scmp.ne.s32.totalorder %s71, %s74
      %p83 = scmp.eq.s32.totalorder %s17, 4
      %p84 = por %p82, %p83
      %p85 = scmp.ne.s32.totalorder %s74, %s75
      %p86 = scmp.eq.s32.totalorder %s17, 0
      %p87 = por %p85, %p86
      %p88 = scmp.ne.s32.totalorder %s74, %s75
      %p89 = scmp.eq.s32.totalorder %s18, 4
      %p90 = por %p88, %p89
      %p92 = scmp.ne.s32.totalorder %s75, %s91
      %p93 = scmp.eq.s32.totalorder %s18, 0
      %p94 = por %p92, %p93
      %s95 = ssub.s32 %s20, %s34
      %p96 = scmp.eq.s32.totalorder %s95, 0
      %s98 = sadd.s32 %s97, 1
      %s99 = scalar_select %p96, %s97, %s98
      %p102 = pneg %p96
      %p103 = scmp.eq.s32.totalorder %s12, 4
      %p104 = por %p102, %p103
      %p105 = scmp.ne.s32.totalorder %s97, %s100
      %p106 = scmp.eq.s32.totalorder %s12, 0
      %p107 = por %p105, %p106
      %p108 = scmp.ne.s32.totalorder %s97, %s100
      %p109 = scmp.eq.s32.totalorder %s17, 4
      %p110 = por %p108, %p109
      %p111 = scmp.ne.s32.totalorder %s100, %s101
      %p112 = scmp.eq.s32.totalorder %s17, 0
      %p113 = por %p111, %p112
      %p114 = scmp.ne.s32.totalorder %s100, %s101
      %p115 = scmp.eq.s32.totalorder %s18, 4
      %p116 = por %p114, %p115
      %p118 = scmp.ne.s32.totalorder %s101, %s117
      %p119 = scmp.eq.s32.totalorder %s18, 0
      %p120 = por %p118, %p119
      %s121 = ssub.s32 %s19, %s38
      %s122 = ssub.s32 %s20, %s34
      %s123 = sor.u32 %s121, %s122
      %p124 = scmp.eq.s32.totalorder %s123, 0
      %s126 = sadd.s32 %s125, 1
      %s127 = scalar_select %p124, %s125, %s126
      %p130 = pneg %p124
      %p131 = scmp.eq.s32.totalorder %s12, 4
      %p132 = por %p130, %p131
      %p133 = scmp.ne.s32.totalorder %s125, %s128
      %p134 = scmp.eq.s32.totalorder %s12, 0
      %p135 = por %p133, %p134
      %p136 = scmp.ne.s32.totalorder %s125, %s128
      %p137 = scmp.eq.s32.totalorder %s17, 4
      %p138 = por %p136, %p137
      %p139 = scmp.ne.s32.totalorder %s128, %s129
      %p140 = scmp.eq.s32.totalorder %s17, 0
      %p141 = por %p139, %p140
      %p142 = scmp.ne.s32.totalorder %s128, %s129
      %p143 = scmp.eq.s32.totalorder %s18, 4
      %p144 = por %p142, %p143
      %p146 = scmp.ne.s32.totalorder %s129, %s145
      %p147 = scmp.eq.s32.totalorder %s18, 0
      %p148 = por %p146, %p147
      %p149 = scmp.le.s32.totalorder 1, %s12
      %p150 = scmp.lt.s32.totalorder %s12, 6
      %p151 = pnand %p149, %p150
      %p152 = pneg %p151
      // Predicated region
      $region9: #{_matmul_call.1} parent=5 // pred_check
        _
      $region10: #{_matmul_call.1} parent=5 // pred_check_branch
        %154 = sbr.rel (%p151) target = $region12
      $region11: #{_matmul_call.1} parent=5 // pred_region
        %s155 = ssub.s32 %s12, 1
        // Predicated region
        $region13: #{_matmul_call.1} parent=11 // pred_check
          %p156 = pneg %p59
        $region14: #{_matmul_call.1} parent=11 // pred_check_branch
          %158 = sbr.rel (%p156) target = $region16
        $region15: #{_matmul_call.1} parent=11 // pred_region
          %s159 = smul.u32 2, %s22
          %s160 = smul.u32 3, %s24
          %p161 = scmp.lt.s32.totalorder %s159, 1
          %s162 = scalar_select %p161, %s159, 1
          %p163 = scmp.lt.s32.totalorder %s160, 2
          %s164 = scalar_select %p163, %s160, 2
          %s165 = smul.addr %s162, 3
          %s166 = sadd.s32 %s164, %s165
          %s167 = smul.addr %s166, 4
          %s168 = scalar_lea.vmem %s0, %s167
          %s169 = smul.u32 2, %s22
          %s170 = smul.u32 3, %s24
        $region16: #{_matmul_call.1} parent=11 // pred_fallthru
          _
      $region12: #{_matmul_call.1} parent=5 // pred_fallthru
        _
      %p171 = scmp.lt.s32.totalorder %s12, 5
      // Predicated region
      $region17: #{_matmul_call.1} parent=5 // pred_check
        %p172 = pneg %p171
      $region18: #{_matmul_call.1} parent=5 // pred_check_branch
        %174 = sbr.rel (%p172) target = $region20
      $region19: #{_matmul_call.1} parent=5 // pred_region
        // Predicated region
        $region21: #{_matmul_call.1} parent=19 // pred_check
          %p175 = pneg %p81
        $region22: #{_matmul_call.1} parent=19 // pred_check_branch
          %177 = sbr.rel (%p175) target = $region24
        $region23: #{_matmul_call.1} parent=19 // pred_region
          %s178 = sand.u32 %s71, 1
          %s179 = scalar_lea.sflag [#allocation3], %s178
          %s180 = sand.u32 %s71, 1
          %s181 = smul.addr %s180, 320
          %s182 = scalar_lea.vmem [#allocation2], %s181
          %s183 = smul.u32 40, %s21
          %s184 = smul.u32 2, %s20
          %s186 = ssub.s32 5120, 5120
          %187 = vsyncadd %s179, %s186
          %s188 = smul.addr %s183, 10
          %s189 = sadd.s32 %s184, %s188
          %s190 = smul.addr %s189, 64
          %s191 = scalar_lea.hbm %s1, %s190
          %s192 = sshll.u32 %s182, 4
          %s193 = int_to_ptr.vmem [resolvable:$true] %s192
          %198 = dma.hbm_to_vmem [thread:$0]  %s191, 5120, %s193, %s179, 640, 128, 8
        $region24: #{_matmul_call.1} parent=19 // pred_fallthru
          _
        // Predicated region
        $region25: #{_matmul_call.1} parent=19 // pred_check
          %p199 = pneg %p107
        $region26: #{_matmul_call.1} parent=19 // pred_check_branch
          %201 = sbr.rel (%p199) target = $region28
        $region27: #{_matmul_call.1} parent=19 // pred_region
          %s202 = smul.u32 2, %s20
          %p203 = scmp.lt.s32.totalorder %s202, 9
          %s204 = scalar_select %p203, %s202, 9
          %s205 = scalar_lea.vmem %s2, %s204
          %s206 = smul.u32 2, %s20
        $region28: #{_matmul_call.1} parent=19 // pred_fallthru
          _
      $region20: #{_matmul_call.1} parent=5 // pred_fallthru
        _
      %p207 = scmp.le.s32.totalorder 1, %s12
      %p208 = scmp.lt.s32.totalorder %s12, 6
      %p209 = pnand %p207, %p208
      %p210 = pneg %p209
      // Predicated region
      $region29: #{_matmul_call.1} parent=5 // pred_check
        _
      $region30: #{_matmul_call.1} parent=5 // pred_check_branch
        %212 = sbr.rel (%p209) target = $region32
      $region31: #{_matmul_call.1} parent=5 // pred_region
        %s213 = ssub.s32 %s12, 1
        %s214 = sand.u32 %s74, 1
        %s215 = scalar_lea.sflag [#allocation3], %s214
        %s216 = sand.u32 %s74, 1
        %s217 = smul.addr %s216, 320
        %s218 = scalar_lea.vmem [#allocation2], %s217
        // Predicated region
        $region33: #{_matmul_call.1} parent=31 // pred_check
          %p219 = pneg %p87
        $region34: #{_matmul_call.1} parent=31 // pred_check_branch
          %221 = sbr.rel (%p219) target = $region36
        $region35: #{_matmul_call.1} parent=31 // pred_region
          %222 = dma.done %s215, 5120
        $region36: #{_matmul_call.1} parent=31 // pred_fallthru
          _
        %s223 = smul.u32 2, %s22
        %s224 = smul.u32 3, %s24
        %p225 = scmp.lt.s32.totalorder %s223, 1
        %s226 = scalar_select %p225, %s223, 1
        %p227 = scmp.lt.s32.totalorder %s224, 2
        %s228 = scalar_select %p227, %s224, 2
        %s229 = smul.addr %s226, 3
        %s230 = sadd.s32 %s228, %s229
        %s231 = smul.addr %s230, 4
        %s232 = scalar_lea.vmem %s0, %s231
        %p233 = pneg %p59
        %p234 = pneg %p56
        %s235 = sand.u32 %s74, 1
        %s236 = scalar_lea.sflag [#allocation3], %s235
        %s237 = sand.u32 %s74, 1
        %s238 = smul.addr %s237, 320
        %s239 = scalar_lea.vmem [#allocation2], %s238
        %p240 = pneg %p87
        %p241 = pneg %p84
        %s242 = smul.u32 2, %s23
        %p243 = scmp.lt.s32.totalorder %s242, 9
        %s244 = scalar_select %p243, %s242, 9
        %s245 = scalar_lea.vmem %s2, %s244
        %p246 = pneg %p113
        %p247 = pneg %p110
        %p248 = pneg %p141
        %p249 = pneg %p138
        %s250 = sand.u32 %s128, 1
        %s251 = sand.u32 %s128, 1
        %s252 = smul.addr %s251, 32
        %s253 = scalar_lea.vmem [#allocation4], %s252
        %s254 = smul.u32 2, %s22
        %s255 = smul.u32 3, %s24
        %p256 = scmp.lt.s32.totalorder %s254, 1
        %s257 = scalar_select %p256, %s254, 1
        %p258 = scmp.lt.s32.totalorder %s255, 2
        %s259 = scalar_select %p258, %s255, 2
        %s260 = smul.addr %s257, 3
        %s261 = sadd.s32 %s259, %s260
        %s262 = smul.addr %s261, 4
        %s263 = scalar_lea.vmem %s0, %s262
        %s264 = smul.u32 2, %s22
        %s265 = smul.u32 3, %s24
        %s266 = smul.u32 40, %s24
        %s267 = smul.u32 2, %s23
        %s268 = smul.u32 2, %s23
        %p269 = scmp.lt.s32.totalorder %s268, 9
        %s270 = scalar_select %p269, %s268, 9
        %s271 = scalar_lea.vmem %s2, %s270
        %s272 = smul.u32 2, %s23
        %s273 = smul.u32 2, %s22
        %s274 = smul.u32 2, %s23
        %v276 = vld [vmem:[%s263] sm:$0xff]
        %v277 = vld [vmem:[%s263 + $0x8] sm:$0xf]
        %v278 = vld [vmem:[%s263 + $0xc] sm:$0xff]
        %v279 = vld [vmem:[%s263 + $0x14] sm:$0xf]
        %v280 = vld [vmem:[%s218] sm:$0xff]
        %v281 = vld [vmem:[%s218 + $0x8] sm:$0xff]
        %v282 = vld [vmem:[%s218 + $0x10] sm:$0xff]
        %v283 = vld [vmem:[%s218 + $0x18] sm:$0xff]
        %v284 = vld [vmem:[%s218 + $0x20] sm:$0xff]
        %v285 = vld [vmem:[%s218 + $0x28] sm:$0xff]
        %v286 = vld [vmem:[%s218 + $0x30] sm:$0xff]
        %v287 = vld [vmem:[%s218 + $0x38] sm:$0xff]
        %v288 = vld [vmem:[%s218 + $0x40] sm:$0xff]
        %v289 = vld [vmem:[%s218 + $0x48] sm:$0xff]
        %v290 = vld [vmem:[%s218 + $0x50] sm:$0xff]
        %v291 = vld [vmem:[%s218 + $0x58] sm:$0xff]
        %v292 = vld [vmem:[%s218 + $0x60] sm:$0xff]
        %v293 = vld [vmem:[%s218 + $0x68] sm:$0xff]
        %v294 = vld [vmem:[%s218 + $0x70] sm:$0xff]
        %v295 = vld [vmem:[%s218 + $0x78] sm:$0xff]
        %v296 = vld [vmem:[%s218 + $0x80] sm:$0xff]
        %v297 = vld [vmem:[%s218 + $0x88] sm:$0xff]
        %v298 = vld [vmem:[%s218 + $0x90] sm:$0xff]
        %v299 = vld [vmem:[%s218 + $0x98] sm:$0xff]
        %v300 = vld [vmem:[%s218 + $0xa0] sm:$0xff]
        %v301 = vld [vmem:[%s218 + $0xa8] sm:$0xff]
        %v302 = vld [vmem:[%s218 + $0xb0] sm:$0xff]
        %v303 = vld [vmem:[%s218 + $0xb8] sm:$0xff]
        %v304 = vld [vmem:[%s218 + $0xc0] sm:$0xff]
        %v305 = vld [vmem:[%s218 + $0xc8] sm:$0xff]
        %v306 = vld [vmem:[%s218 + $0xd0] sm:$0xff]
        %v307 = vld [vmem:[%s218 + $0xd8] sm:$0xff]
        %v308 = vld [vmem:[%s218 + $0xe0] sm:$0xff]
        %v309 = vld [vmem:[%s218 + $0xe8] sm:$0xff]
        %v310 = vld [vmem:[%s218 + $0xf0] sm:$0xff]
        %v311 = vld [vmem:[%s218 + $0xf8] sm:$0xff]
        %v312 = vld [vmem:[%s218 + $0x100] sm:$0xff]
        %v313 = vld [vmem:[%s218 + $0x108] sm:$0xff]
        %v314 = vld [vmem:[%s218 + $0x110] sm:$0xff]
        %v315 = vld [vmem:[%s218 + $0x118] sm:$0xff]
        %v316 = vld [vmem:[%s218 + $0x120] sm:$0xff]
        %v317 = vld [vmem:[%s218 + $0x128] sm:$0xff]
        %v318 = vld [vmem:[%s218 + $0x130] sm:$0xff]
        %v319 = vld [vmem:[%s218 + $0x138] sm:$0xff]
        %v320 = vld [vmem:[%s271] sm:$0x3]
        %v322 = vlaneseq
        %v323 = vshrl.u32 %v322, 7
        %v324 = vsub.s32 0, %v323
        %v325 = vrot.slane %v320, %v324
        %v326 = vlaneseq
        %v327 = vshrl.u32 %v326, 7
        %v328 = vsub.s32 1, %v327
        %v329 = vrot.slane %v320, %v328
        %v336 = vunpack.c.l.b16 %v276
        %v337 = vunpack.c.h.b16 %v276
        %v338 = vunpack.c.l.b16 %v277
        %v339 = vunpack.c.l.b16 %v278
        %v340 = vunpack.c.h.b16 %v278
        %v341 = vunpack.c.l.b16 %v279
        %v342 = vpack.c.b16 %v339, %v336
        %v343 = vpack.c.b16 %v340, %v337
        %v344 = vpack.c.b16 %v341, %v338
        %v387 = vunpack.c.l.b16 %v280
        %v388 = vunpack.c.h.b16 %v280
        %v389 = vunpack.c.l.b16 %v281
        %v390 = vunpack.c.h.b16 %v281
        %v391 = vunpack.c.l.b16 %v282
        %v392 = vunpack.c.h.b16 %v282
        %v393 = vunpack.c.l.b16 %v283
        %v394 = vunpack.c.h.b16 %v283
        %v395 = vunpack.c.l.b16 %v284
        %v396 = vunpack.c.h.b16 %v284
        %v397 = vunpack.c.l.b16 %v285
        %v398 = vunpack.c.h.b16 %v285
        %v399 = vunpack.c.l.b16 %v286
        %v400 = vunpack.c.h.b16 %v286
        %v401 = vunpack.c.l.b16 %v287
        %v402 = vunpack.c.h.b16 %v287
        %v403 = vunpack.c.l.b16 %v288
        %v404 = vunpack.c.h.b16 %v288
        %v405 = vunpack.c.l.b16 %v289
        %v406 = vunpack.c.h.b16 %v289
        %v407 = vunpack.c.l.b16 %v290
        %v408 = vunpack.c.h.b16 %v290
        %v409 = vunpack.c.l.b16 %v291
        %v410 = vunpack.c.h.b16 %v291
        %v411 = vunpack.c.l.b16 %v292
        %v412 = vunpack.c.h.b16 %v292
        %v413 = vunpack.c.l.b16 %v293
        %v414 = vunpack.c.h.b16 %v293
        %v415 = vunpack.c.l.b16 %v294
        %v416 = vunpack.c.h.b16 %v294
        %v417 = vunpack.c.l.b16 %v295
        %v418 = vunpack.c.h.b16 %v295
        %v419 = vunpack.c.l.b16 %v296
        %v420 = vunpack.c.h.b16 %v296
        %v421 = vunpack.c.l.b16 %v297
        %v422 = vunpack.c.h.b16 %v297
        %v423 = vunpack.c.l.b16 %v298
        %v424 = vunpack.c.h.b16 %v298
        %v425 = vunpack.c.l.b16 %v299
        %v426 = vunpack.c.h.b16 %v299
        %v427 = vunpack.c.l.b16 %v300
        %v428 = vunpack.c.h.b16 %v300
        %v429 = vunpack.c.l.b16 %v301
        %v430 = vunpack.c.h.b16 %v301
        %v431 = vunpack.c.l.b16 %v302
        %v432 = vunpack.c.h.b16 %v302
        %v433 = vunpack.c.l.b16 %v303
        %v434 = vunpack.c.h.b16 %v303
        %v435 = vunpack.c.l.b16 %v304
        %v436 = vunpack.c.h.b16 %v304
        %v437 = vunpack.c.l.b16 %v305
        %v438 = vunpack.c.h.b16 %v305
        %v439 = vunpack.c.l.b16 %v306
        %v440 = vunpack.c.h.b16 %v306
        %v441 = vunpack.c.l.b16 %v307
        %v442 = vunpack.c.h.b16 %v307
        %v443 = vunpack.c.l.b16 %v308
        %v444 = vunpack.c.h.b16 %v308
        %v445 = vunpack.c.l.b16 %v309
        %v446 = vunpack.c.h.b16 %v309
        %v447 = vunpack.c.l.b16 %v310
        %v448 = vunpack.c.h.b16 %v310
        %v449 = vunpack.c.l.b16 %v311
        %v450 = vunpack.c.h.b16 %v311
        %v451 = vunpack.c.l.b16 %v312
        %v452 = vunpack.c.h.b16 %v312
        %v453 = vunpack.c.l.b16 %v313
        %v454 = vunpack.c.h.b16 %v313
        %v455 = vunpack.c.l.b16 %v314
        %v456 = vunpack.c.h.b16 %v314
        %v457 = vunpack.c.l.b16 %v315
        %v458 = vunpack.c.h.b16 %v315
        %v459 = vunpack.c.l.b16 %v316
        %v460 = vunpack.c.h.b16 %v316
        %v461 = vunpack.c.l.b16 %v317
        %v462 = vunpack.c.h.b16 %v317
        %v463 = vunpack.c.l.b16 %v318
        %v464 = vunpack.c.h.b16 %v318
        %v465 = vunpack.c.l.b16 %v319
        %v466 = vunpack.c.h.b16 %v319
        %v467 = vpack.c.b16 %v389, %v387
        %v468 = vpack.c.b16 %v390, %v388
        %v469 = vpack.c.b16 %v393, %v391
        %v470 = vpack.c.b16 %v394, %v392
        %v471 = vpack.c.b16 %v397, %v395
        %v472 = vpack.c.b16 %v398, %v396
        %v473 = vpack.c.b16 %v401, %v399
        %v474 = vpack.c.b16 %v402, %v400
        %v475 = vpack.c.b16 %v405, %v403
        %v476 = vpack.c.b16 %v406, %v404
        %v477 = vpack.c.b16 %v409, %v407
        %v478 = vpack.c.b16 %v410, %v408
        %v479 = vpack.c.b16 %v413, %v411
        %v480 = vpack.c.b16 %v414, %v412
        %v481 = vpack.c.b16 %v417, %v415
        %v482 = vpack.c.b16 %v418, %v416
        %v483 = vpack.c.b16 %v421, %v419
        %v484 = vpack.c.b16 %v422, %v420
        %v485 = vpack.c.b16 %v425, %v423
        %v486 = vpack.c.b16 %v426, %v424
        %v487 = vpack.c.b16 %v429, %v427
        %v488 = vpack.c.b16 %v430, %v428
        %v489 = vpack.c.b16 %v433, %v431
        %v490 = vpack.c.b16 %v434, %v432
        %v491 = vpack.c.b16 %v437, %v435
        %v492 = vpack.c.b16 %v438, %v436
        %v493 = vpack.c.b16 %v441, %v439
        %v494 = vpack.c.b16 %v442, %v440
        %v495 = vpack.c.b16 %v445, %v443
        %v496 = vpack.c.b16 %v446, %v444
        %v497 = vpack.c.b16 %v449, %v447
        %v498 = vpack.c.b16 %v450, %v448
        %v499 = vpack.c.b16 %v453, %v451
        %v500 = vpack.c.b16 %v454, %v452
        %v501 = vpack.c.b16 %v457, %v455
        %v502 = vpack.c.b16 %v458, %v456
        %v503 = vpack.c.b16 %v461, %v459
        %v504 = vpack.c.b16 %v462, %v460
        %v505 = vpack.c.b16 %v465, %v463
        %v506 = vpack.c.b16 %v466, %v464
        %vm547 = vcmask 523264
        %v549 = vsel %vm547, %v344, 0
        %551 = vmatprep.subr.bf16.mxu0 %v468
        %552 = vmatpush1.bf16.msra.mxu0 %v467
        %553 = vmatprep.subr.bf16.mxu0 %v470
        %554 = vmatpush1.bf16.msra.mxu0 %v469
        %555 = vmatprep.subr.bf16.mxu0 %v472
        %556 = vmatpush1.bf16.msra.mxu0 %v471
        %557 = vmatprep.subr.bf16.mxu0 %v474
        %558 = vmatpush1.bf16.msra.mxu0 %v473
        %559 = vmatprep.subr.bf16.mxu0 %v476
        %560 = vmatpush1.bf16.msra.mxu0 %v475
        %561 = vmatprep.subr.bf16.mxu0 %v478
        %562 = vmatpush1.bf16.msra.mxu0 %v477
        %563 = vmatprep.subr.bf16.mxu0 %v480
        %564 = vmatpush1.bf16.msra.mxu0 %v479
        %565 = vmatprep.subr.bf16.mxu0 %v482
        %566 = vmatpush1.bf16.msra.mxu0 %v481
        %567 = vmatprep.subr.bf16.mxu0 %v484
        %568 = vmatpush1.bf16.msra.mxu0 %v483
        %569 = vmatprep.subr.bf16.mxu0 %v486
        %570 = vmatpush1.bf16.msra.mxu0 %v485
        %571 = vmatprep.subr.bf16.mxu0 %v488
        %572 = vmatpush1.bf16.msra.mxu0 %v487
        %573 = vmatprep.subr.bf16.mxu0 %v490
        %574 = vmatpush1.bf16.msra.mxu0 %v489
        %575 = vmatprep.subr.bf16.mxu0 %v492
        %576 = vmatpush1.bf16.msra.mxu0 %v491
        %577 = vmatprep.subr.bf16.mxu0 %v494
        %578 = vmatpush1.bf16.msra.mxu0 %v493
        %579 = vmatprep.subr.bf16.mxu0 %v496
        %580 = vmatpush1.bf16.msra.mxu0 %v495
        %581 = vmatprep.subr.bf16.mxu0 %v498
        %582 = vmatpush1.bf16.msra.mxu0 %v497
        %583 = vmatprep.mubr.bf16.mxu0 %v343
        %584 = vmatmul.mubr.bf16.gmra.mrb[0].mxu0 %v342
        %v585 = vpop.f32.mrb[0].mxu0
        %v586 = vadd.f32 %v325, %v585
        %v587 = vpop.f32.mrb[0].mxu0
        %v588 = vadd.f32 %v329, %v587
        %v589 = vpop.f32.mrb[0].mxu0
        %v590 = vadd.f32 %v325, %v589
        %v591 = vpop.f32.mrb[0].mxu0
        %v592 = vadd.f32 %v329, %v591
        %593 = vdwg.mxu0
        %594 = vmatprep.subr.bf16.mxu0 %v500
        %595 = vmatpush1.bf16.msra.mxu0 %v499
        %596 = vmatprep.subr.bf16.mxu0 %v502
        %597 = vmatpush1.bf16.msra.mxu0 %v501
        %598 = vmatprep.subr.bf16.mxu0 %v504
        %599 = vmatpush1.bf16.msra.mxu0 %v503
        %600 = vmatprep.subr.bf16.mxu0 %v506
        %601 = vmatpush1.bf16.msra.mxu0 %v505
        %602 = vmatprep.subr.bf16.mxu0 0
        %603 = vmatpush1.bf16.msra.mxu0 0
        %604 = vmatprep.subr.bf16.mxu0 0
        %605 = vmatpush1.bf16.msra.mxu0 0
        %606 = vmatprep.subr.bf16.mxu0 0
        %607 = vmatpush1.bf16.msra.mxu0 0
        %608 = vmatprep.subr.bf16.mxu0 0
        %609 = vmatpush1.bf16.msra.mxu0 0
        %610 = vmatprep.subr.bf16.mxu0 0
        %611 = vmatpush1.bf16.msra.mxu0 0
        %612 = vmatprep.subr.bf16.mxu0 0
        %613 = vmatpush1.bf16.msra.mxu0 0
        %614 = vmatprep.subr.bf16.mxu0 0
        %615 = vmatpush1.bf16.msra.mxu0 0
        %616 = vmatprep.subr.bf16.mxu0 0
        %617 = vmatpush1.bf16.msra.mxu0 0
        %618 = vmatprep.subr.bf16.mxu0 0
        %619 = vmatpush1.bf16.msra.mxu0 0
        %620 = vmatprep.subr.bf16.mxu0 0
        %621 = vmatpush1.bf16.msra.mxu0 0
        %622 = vmatprep.subr.bf16.mxu0 0
        %623 = vmatpush1.bf16.msra.mxu0 0
        %624 = vmatprep.subr.bf16.mxu0 0
        %625 = vmatpush1.bf16.msra.mxu0 0
        %626 = vmatprep.mubr.bf16.mxu0 0
        %627 = vmatmul.mubr.bf16.gmra.mrb[0].mxu0 %v549
        %v628 = vpop.f32.mrb[0].mxu0
        %v629 = vadd.f32 %v586, %v628
        %v630 = vpop.f32.mrb[0].mxu0
        %v631 = vadd.f32 %v588, %v630
        %v632 = vpop.f32.mrb[0].mxu0
        %v633 = vadd.f32 %v590, %v632
        %v634 = vpop.f32.mrb[0].mxu0
        %v635 = vadd.f32 %v592, %v634
        %636 = vdwg.mxu0
        %v637 = vxor.u32 %v629, 2147483648
        %v638 = vxor.u32 %v631, 2147483648
        %v639 = vxor.u32 %v633, 2147483648
        %v640 = vxor.u32 %v635, 2147483648
        %v641 = vmul.f32 %v637, 1.442695
        %v642 = vpow.pop %v641
        %v643 = vmul.f32 %v638, 1.442695
        %v644 = vpow.pop %v643
        %v645 = vmul.f32 %v639, 1.442695
        %v646 = vpow.pop %v645
        %v647 = vmul.f32 %v640, 1.442695
        %v648 = vpow.pop %v647
        %v649 = vadd.f32 %v642, 1.0
        %v650 = vadd.f32 %v644, 1.0
        %v651 = vadd.f32 %v646, 1.0
        %v652 = vadd.f32 %v648, 1.0
        %v653 = vrcp.pop %v649
        %v654 = vmul.f32 1.0, %v653
        %v655 = vrcp.pop %v650
        %v656 = vmul.f32 1.0, %v655
        %v657 = vrcp.pop %v651
        %v658 = vmul.f32 1.0, %v657
        %v659 = vrcp.pop %v652
        %v660 = vmul.f32 1.0, %v659
        %v661 = vmul.f32 %v629, %v654
        %v662 = vmul.f32 %v631, %v656
        %v663 = vmul.f32 %v633, %v658
        %v664 = vmul.f32 %v635, %v660
        %665 = vst [vmem:[%s253] sm:$0xff] %v661
        %666 = vst [vmem:[%s253 + $0x8] sm:$0xff] %v662
        %667 = vst [vmem:[%s253 + $0x10] sm:$0xff] %v663
        %668 = vst [vmem:[%s253 + $0x18] sm:$0xff] %v664
        %s669 = sand.u32 %s128, 1
        %s670 = sand.u32 %s128, 1
        %s671 = smul.addr %s670, 32
        %s672 = scalar_lea.vmem [#allocation4], %s671
        // Predicated region
        $region37: #{_matmul_call.1} parent=31 // pred_check
          %p673 = pneg %p138
        $region38: #{_matmul_call.1} parent=31 // pred_check_branch
          %675 = sbr.rel (%p673) target = $region40
        $region39: #{_matmul_call.1} parent=31 // pred_region
          %s676 = smul.u32 2, %s22
          %s677 = smul.u32 2, %s23
          %s678 = smul.addr %s676, 10
          %s679 = sadd.s32 %s677, %s678
          %s680 = smul.addr %s679, 8
          %s681 = scalar_lea.vmem %s3, %s680
          // Predicated region
          $region41: #{_matmul_call.1} parent=39 // pred_check
            _
          $region42: #{_matmul_call.1} parent=39 // pred_check_branch
            %683 = sbr.rel (0) target = $region44
          $region43: #{_matmul_call.1} parent=39 // pred_region
            // Predicated region
            $region45: #{_matmul_call.1} parent=43 // pred_check
              _
            $region46: #{_matmul_call.1} parent=43 // pred_check_branch
              %685 = sbr.rel (0) target = $region48
            $region47: #{_matmul_call.1} parent=43 // pred_region
              loop: start=0, step=1, limit=1
              $region49: #{_matmul_call.1} parent=47 // loop_pre_header
                _
              $region50: #{_matmul_call.1} parent=47 // loop_header
                %s687 = sphi 0, %s691
                %p688 = scmp.ge.s32.totalorder %s687, 1
                %s692 = sphi %s672, %s672
                %s693 = sphi %s681, %s681
              $region51: #{_matmul_call.1} parent=47 // loop_header_branch
                %690 = sbr.rel (%p688) target = $region55
              $region52: #{_matmul_call.1} parent=47 // loop_body
                %v694 = vld [vmem:[%s692] sm:$0xff]
                %695 = vst [vmem:[%s693] sm:$0xff] %v694
                %v696 = vld [vmem:[%s692 + $0x8] sm:$0xff]
                %697 = vst [vmem:[%s693 + $0x8] sm:$0xff] %v696
                %v698 = vld [vmem:[%s692 + $0x10] sm:$0xff]
                %699 = vst [vmem:[%s693 + $0x50] sm:$0xff] %v698
                %v700 = vld [vmem:[%s692 + $0x18] sm:$0xff]
                %701 = vst [vmem:[%s693 + $0x58] sm:$0xff] %v700
              $region53: #{_matmul_call.1} parent=47 // loop_footer
                %s691 = sadd.s32 1, %s687
              $region54: #{_matmul_call.1} parent=47 // loop_footer_branch
                %686 = sbr.rel target = $region50
              $region55: #{_matmul_call.1} parent=47 // loop_exit
                _
            $region48: #{_matmul_call.1} parent=43 // pred_fallthru
              _
            // Predicated region
            $region56: #{_matmul_call.1} parent=43 // pred_check
              _
            $region57: #{_matmul_call.1} parent=43 // pred_check_branch
              %703 = sbr.rel target = $region59
            $region58: #{_matmul_call.1} parent=43 // pred_region
              _
            $region59: #{_matmul_call.1} parent=43 // pred_fallthru
              _
          $region44: #{_matmul_call.1} parent=39 // pred_fallthru
            _
          %704 = vnop
        $region40: #{_matmul_call.1} parent=31 // pred_fallthru
          _
      $region32: #{_matmul_call.1} parent=5 // pred_fallthru
        _
      %p705 = scmp.le.s32.totalorder 2, %s12
      // Predicated region
      $region60: #{_matmul_call.1} parent=5 // pred_check
        %p706 = pneg %p705
      $region61: #{_matmul_call.1} parent=5 // pred_check_branch
        %708 = sbr.rel (%p706) target = $region63
      $region62: #{_matmul_call.1} parent=5 // pred_region
        %s709 = ssub.s32 %s12, 2
        // Predicated region
        $region64: #{_matmul_call.1} parent=62 // pred_check
          %p710 = pneg %p144
        $region65: #{_matmul_call.1} parent=62 // pred_check_branch
          %712 = sbr.rel (%p710) target = $region67
        $region66: #{_matmul_call.1} parent=62 // pred_region
          %s713 = sand.u32 %s129, 1
          %s714 = sand.u32 %s129, 1
          %s715 = smul.addr %s714, 32
          %s716 = scalar_lea.vmem [#allocation4], %s715
        $region67: #{_matmul_call.1} parent=62 // pred_fallthru
          _
      $region63: #{_matmul_call.1} parent=5 // pred_fallthru
        _
    $region6: #{_matmul_call.1} parent=1 // loop_footer
      %s16 = sadd.s32 1, %s12
    $region7: #{_matmul_call.1} parent=1 // loop_footer_branch
      %11 = sbr.rel target = $region3
    $region8: #{_matmul_call.1} parent=1 // loop_exit
      _
    %717 = vsyncpa [#allocation3], 1
    %s718 = scalar_lea.sflag [#allocation3], 1
    %719 = vsyncpa %s718, 1

</llo_original>
